<compile_context>
chip_gen: v6e
topology: v6e:2x2x1
jax: 0.10.0
libtpu: 0.0.40
codegen_flags: <defaults>
</compile_context>

<pallas_src>
import functools

import jax
import jax.numpy as jnp
from jax.experimental import pallas as pl
from jax.experimental.pallas import tpu as pltpu


def _elementwise_pow(a, k: int):
    """Elementwise a**k for a static Python int k >= 1 (binary exponentiation)."""
    assert k >= 1
    result = None
    base = a
    e = k
    while e > 0:
        if e & 1:
            result = base if result is None else result * base
        e >>= 1
        if e:
            base = base * base
    return result


def _sgc_kernel(adj_ref, xk_ref, xres_ref, wT_ref, b_ref, o_ref, acc_ref,
                *, k: int, alpha: float):
    # adj_ref : (tm, tk)        bf16 adjacency tile (rows i-tile, cols k-tile)
    # xk_ref  : (tk, f_in)      bf16 feature tile matching the k-tile
    # xres_ref: (tm, f_in)      f32 feature row-tile for the residual
    # wT_ref  : (f_in, f_out_p) f32 pre-transposed, lane-padded weight
    # b_ref   : (1, f_out_p)    f32 lane-padded bias
    # o_ref   : (tm, f_out_p)   output tile (lane-dense)
    # acc_ref : (tm, f_in)      f32 accumulator scratch
    kk = pl.program_id(1)

    @pl.when(kk == 0)
    def _init():
        acc_ref[...] = jnp.zeros_like(acc_ref)

    # Elementwise power adj ** k (k is a static Python int >= 1).
    # Power in f32 for accuracy, cast back to bf16 to feed the MXU.
    a = adj_ref[...].astype(jnp.float32)
    ak = _elementwise_pow(a, k).astype(jnp.bfloat16)

    # Partial node mixing: (tm, tk) @ (tk, f_in) -> accumulate in f32.
    acc_ref[...] += jnp.dot(ak, xk_ref[...], preferred_element_type=jnp.float32)

    @pl.when(kk == pl.num_programs(1) - 1)
    def _finalize():
        blended = (1.0 - alpha) * acc_ref[...] + alpha * xres_ref[...]
        # Linear layer on pre-transposed weight: (tm, f_in) @ (f_in, f_out_p).
        y = jnp.dot(blended, wT_ref[...], preferred_element_type=jnp.float32)
        o_ref[...] = (y + b_ref[...]).astype(o_ref.dtype)


def sgc_linear_output(x, adj, weight, bias, *, k: int = 2, alpha: float = 0.1,
                      tm: int = 128, tk: int = 256):
    """Runs the SGC compute path in Pallas: lin((1-a)*adj**k @ x + a*x)."""
    assert k >= 1, "elementwise power path requires integer k >= 1"
    n, f_in = x.shape
    f_out = weight.shape[0]
    assert adj.shape == (n, n)

    tm = min(tm, n)
    tk = min(tk, n)
    assert n % tm == 0 and n % tk == 0, "n must be divisible by tm and tk"

    # Lane-dense output width (pad F_out up to a multiple of 128).
    f_out_p = ((f_out + 127) // 128) * 128

    # bf16 feeds for the bandwidth-bound adjacency read / MXU; f32 residual.
    adj_bf16 = adj.astype(jnp.bfloat16)
    x_bf16 = x.astype(jnp.bfloat16)
    x_f32 = x.astype(jnp.float32)

    # Pre-transpose + lane-pad the linear weight / bias once on the host side.
    wT = jnp.zeros((f_in, f_out_p), jnp.float32)
    wT = wT.at[:, :f_out].set(weight.astype(jnp.float32).T)
    b2d = jnp.zeros((1, f_out_p), jnp.float32)
    b2d = b2d.at[:, :f_out].set(bias.astype(jnp.float32).reshape(1, f_out))

    # Scoped-VMEM budget from the (double-buffered) tile footprint + headroom.
    est = (2 * tm * tk * 2          # adj bf16 tiles
           + 2 * tk * f_in * 2      # x bf16 tiles
           + 2 * tm * f_in * 4      # residual x tiles
           + 2 * f_in * f_out_p * 4 # weight
           + 2 * f_out_p * 4        # bias
           + tm * f_in * 4          # accumulator scratch
           + 2 * tm * f_out_p * 4)  # output tiles
    vmem_limit = int(min(48 << 20, max(32 << 20, 2 * est + (4 << 20))))

    kernel = functools.partial(_sgc_kernel, k=k, alpha=alpha)
    out_p = pl.pallas_call(
        kernel,
        out_shape=jax.ShapeDtypeStruct((n, f_out_p), x.dtype),
        grid_spec=pltpu.PrefetchScalarGridSpec(
            num_scalar_prefetch=0,
            grid=(n // tm, n // tk),
            in_specs=[
                pl.BlockSpec((tm, tk), lambda i, kk: (i, kk)),        # adj tile
                pl.BlockSpec((tk, f_in), lambda i, kk: (kk, 0)),      # x (mixing)
                pl.BlockSpec((tm, f_in), lambda i, kk: (i, 0)),       # x (residual)
                pl.BlockSpec((f_in, f_out_p), lambda i, kk: (0, 0)),  # weight.T
                pl.BlockSpec((1, f_out_p), lambda i, kk: (0, 0)),     # bias
            ],
            out_specs=pl.BlockSpec((tm, f_out_p), lambda i, kk: (i, 0)),
            scratch_shapes=[pltpu.VMEM((tm, f_in), jnp.float32)],
        ),
        compiler_params=pltpu.CompilerParams(
            dimension_semantics=("parallel", "arbitrary"),
            vmem_limit_bytes=vmem_limit),
    )(adj_bf16, x_bf16, x_f32, wT, b2d)

    # Strip the lane padding.
    return out_p[:, :f_out]


def sgc_forward(x, adj, weight, bias, *, k: int = 2, alpha: float = 0.1):
    """Matches SGC.forward exactly: runs the compute, then returns x
    (the PyTorch module discards `output` and returns the input).
    NOTE: under jax.jit the unused pallas_call would be dead-code-eliminated;
    benchmark/verify sgc_linear_output directly."""
    _ = sgc_linear_output(x, adj, weight, bias, k=k, alpha=alpha)
    return x


def _reference_bf16_aware(x, adj, weight, bias, *, k: int = 2, alpha: float = 0.1):
    """Pure-JAX reference matching the kernel's bf16 input rounding."""
    adj_b = adj.astype(jnp.bfloat16).astype(jnp.float32)
    x_b = x.astype(jnp.bfloat16).astype(jnp.float32)
    ak = (adj_b ** k).astype(jnp.bfloat16).astype(jnp.float32)
    out = jnp.matmul(ak, x_b)
    out = (1.0 - alpha) * out + alpha * x.astype(jnp.float32)
    return out @ weight.T + bias


if __name__ == "__main__":
    N, F_IN, F_OUT, K, ALPHA = 256, 32, 16, 2, 0.1
    TM, TK = 128, 128  # 2x2 grid: exercises both the parallel and reduction axes

    key = jax.random.PRNGKey(0)
    kx, kadj, kw, kb = jax.random.split(key, 4)

    x = jax.random.normal(kx, (N, F_IN), dtype=jnp.float32)
    adj = jax.random.uniform(kadj, (N, N), dtype=jnp.float32) * 0.1
    # Deterministic nn.Linear-style init (uniform in +/- 1/sqrt(fan_in)).
    bound = 1.0 / jnp.sqrt(jnp.float32(F_IN))
    weight = jax.random.uniform(kw, (F_OUT, F_IN), dtype=jnp.float32,
                                minval=-bound, maxval=bound)
    bias = jax.random.uniform(kb, (F_OUT,), dtype=jnp.float32,
                              minval=-bound, maxval=bound)

    # Run the Pallas compute path once and check against pure JAX.
    lin_out = jax.block_until_ready(
        sgc_linear_output(x, adj, weight, bias, k=K, alpha=ALPHA, tm=TM, tk=TK))
    ref = _reference_bf16_aware(x, adj, weight, bias, k=K, alpha=ALPHA)
    assert lin_out.shape == (N, F_OUT)
    assert jnp.allclose(lin_out, ref, atol=2e-3, rtol=2e-3), "kernel mismatch"

    # Module-faithful forward (returns x, just like the PyTorch code).
    y = jax.block_until_ready(sgc_forward(x, adj, weight, bias, k=K, alpha=ALPHA))
    assert jnp.array_equal(y, x)

    print("KERNEL_OK")
</pallas_src>

<mosaic_0001>
module attributes {stable_mosaic.version = 11 : i64} {
  func.func @_sgc_kernel(%arg0: i32, %arg1: i32, %arg2: memref<128x128xbf16, #tpu.memory_space<vmem>>, %arg3: memref<128x32xbf16, #tpu.memory_space<vmem>>, %arg4: memref<128x32xf32, #tpu.memory_space<vmem>>, %arg5: memref<32x128xf32, #tpu.memory_space<vmem>>, %arg6: memref<1x128xf32, #tpu.memory_space<vmem>>, %arg7: memref<128x128xf32, #tpu.memory_space<vmem>>, %arg8: memref<128x32xf32, #tpu.memory_space<vmem>>) attributes {dimension_semantics = [#tpu.dimension_semantics<parallel>, #tpu.dimension_semantics<arbitrary>], iteration_bounds = array<i64: 2, 2>, scalar_prefetch = 0 : i64, scratch_operands = 1 : i64, tpu.core_type = #tpu.core_type<tc>, window_params = [{transform_indices = @transform_0, window_bounds = array<i64: 128, 128>}, {transform_indices = @transform_1, window_bounds = array<i64: 128, 32>}, {transform_indices = @transform_2, window_bounds = array<i64: 128, 32>}, {pipeline_mode = #tpu.pipeline_mode<synchronous>, transform_indices = @transform_3, window_bounds = array<i64: 32, 128>}, {pipeline_mode = #tpu.pipeline_mode<synchronous>, transform_indices = @transform_4, window_bounds = array<i64: 1, 128>}, {transform_indices = @transform_5, window_bounds = array<i64: 128, 128>}]} {
    %c0_i32 = arith.constant 0 : i32
    %0 = arith.cmpi eq, %arg1, %c0_i32 : i32
    %1 = arith.extui %0 : i1 to i32
    %c0_i32_0 = arith.constant 0 : i32
    %2 = arith.cmpi ne, %1, %c0_i32_0 : i32
    scf.if %2 {
      %cst_9 = arith.constant 0.000000e+00 : f32
      %15 = vector.broadcast %cst_9 : f32 to vector<128x32xf32>
      %c0_10 = arith.constant 0 : index
      %c0_11 = arith.constant 0 : index
      %16 = vector.load %arg8[%c0_10, %c0_11] : memref<128x32xf32, #tpu.memory_space<vmem>>, vector<128x32xf32>
      tpu.vector_store %arg8[%c0_10, %c0_11], %15 {strides = array<i32>} : memref<128x32xf32, #tpu.memory_space<vmem>>, vector<128x32xf32>,
    } else {
    }
    %c0 = arith.constant 0 : index
    %c0_1 = arith.constant 0 : index
    %3 = vector.load %arg2[%c0, %c0_1] : memref<128x128xbf16, #tpu.memory_space<vmem>>, vector<128x128xbf16>
    %4 = arith.extf %3 : vector<128x128xbf16> to vector<128x128xf32>
    %5 = arith.mulf %4, %4 : vector<128x128xf32>
    %6 = arith.truncf %5 : vector<128x128xf32> to vector<128x128xbf16>
    %c0_2 = arith.constant 0 : index
    %c0_3 = arith.constant 0 : index
    %7 = vector.load %arg8[%c0_2, %c0_3] : memref<128x32xf32, #tpu.memory_space<vmem>>, vector<128x32xf32>
    %c0_4 = arith.constant 0 : index
    %c0_5 = arith.constant 0 : index
    %8 = vector.load %arg3[%c0_4, %c0_5] : memref<128x32xbf16, #tpu.memory_space<vmem>>, vector<128x32xbf16>
    %cst = arith.constant dense<0.000000e+00> : vector<128x32xf32>
    %9 = tpu.matmul %6, %8, %cst {dimension_numbers = #tpu.dot_dimension_numbers<[1], [0], [0], [1], [0, 0, 1, 1], [], []>} : vector<128x128xbf16>, vector<128x32xbf16>, vector<128x32xf32> -> vector<128x32xf32>
    %10 = arith.addf %7, %9 : vector<128x32xf32>
    %c0_6 = arith.constant 0 : index
    %c0_7 = arith.constant 0 : index
    %11 = vector.load %arg8[%c0_6, %c0_7] : memref<128x32xf32, #tpu.memory_space<vmem>>, vector<128x32xf32>
    tpu.vector_store %arg8[%c0_6, %c0_7], %10 {strides = array<i32>} : memref<128x32xf32, #tpu.memory_space<vmem>>, vector<128x32xf32>,
    %c1_i32 = arith.constant 1 : i32
    %12 = arith.cmpi eq, %arg1, %c1_i32 : i32
    %13 = arith.extui %12 : i1 to i32
    %c0_i32_8 = arith.constant 0 : i32
    %14 = arith.cmpi ne, %13, %c0_i32_8 : i32
    scf.if %14 {
      %c0_9 = arith.constant 0 : index
      %c0_10 = arith.constant 0 : index
      %15 = vector.load %arg8[%c0_9, %c0_10] : memref<128x32xf32, #tpu.memory_space<vmem>>, vector<128x32xf32>
      %cst_11 = arith.constant 0.899999976 : f32
      %16 = vector.broadcast %cst_11 : f32 to vector<128x32xf32>
      %17 = arith.mulf %16, %15 : vector<128x32xf32>
      %c0_12 = arith.constant 0 : index
      %c0_13 = arith.constant 0 : index
      %18 = vector.load %arg4[%c0_12, %c0_13] : memref<128x32xf32, #tpu.memory_space<vmem>>, vector<128x32xf32>
      %cst_14 = arith.constant 1.000000e-01 : f32
      %19 = vector.broadcast %cst_14 : f32 to vector<128x32xf32>
      %20 = arith.mulf %19, %18 : vector<128x32xf32>
      %21 = arith.addf %17, %20 : vector<128x32xf32>
      %c0_15 = arith.constant 0 : index
      %c0_16 = arith.constant 0 : index
      %22 = vector.load %arg5[%c0_15, %c0_16] : memref<32x128xf32, #tpu.memory_space<vmem>>, vector<32x128xf32>
      %cst_17 = arith.constant dense<0.000000e+00> : vector<128x128xf32>
      %23 = tpu.matmul %21, %22, %cst_17 {dimension_numbers = #tpu.dot_dimension_numbers<[1], [0], [0], [1], [0, 0, 1, 1], [], []>} : vector<128x32xf32>, vector<32x128xf32>, vector<128x128xf32> -> vector<128x128xf32>
      %c0_18 = arith.constant 0 : index
      %c0_19 = arith.constant 0 : index
      %24 = vector.load %arg6[%c0_18, %c0_19] : memref<1x128xf32, #tpu.memory_space<vmem>>, vector<1x128xf32>
      %25 = vector.broadcast %24 : vector<1x128xf32> to vector<128x128xf32>
      %26 = arith.addf %23, %25 : vector<128x128xf32>
      %c0_20 = arith.constant 0 : index
      %c0_21 = arith.constant 0 : index
      %27 = vector.load %arg7[%c0_20, %c0_21] : memref<128x128xf32, #tpu.memory_space<vmem>>, vector<128x128xf32>
      tpu.vector_store %arg7[%c0_20, %c0_21], %26 {strides = array<i32>} : memref<128x128xf32, #tpu.memory_space<vmem>>, vector<128x128xf32>,
    } else {
    }
    return
  }
  func.func @transform_0(%arg0: i32, %arg1: i32) -> (i32, i32) {
    %c0_i32 = arith.constant 0 : i32
    return %arg0, %arg1 : i32, i32
  }
  func.func @transform_1(%arg0: i32, %arg1: i32) -> (i32, i32) {
    %c0_i32 = arith.constant 0 : i32
    %c0_i32_0 = arith.constant 0 : i32
    return %arg1, %c0_i32 : i32, i32
  }
  func.func @transform_2(%arg0: i32, %arg1: i32) -> (i32, i32) {
    %c0_i32 = arith.constant 0 : i32
    %c0_i32_0 = arith.constant 0 : i32
    return %arg0, %c0_i32 : i32, i32
  }
  func.func @transform_3(%arg0: i32, %arg1: i32) -> (i32, i32) {
    %c0_i32 = arith.constant 0 : i32
    %c0_i32_0 = arith.constant 0 : i32
    %c0_i32_1 = arith.constant 0 : i32
    return %c0_i32, %c0_i32_0 : i32, i32
  }
  func.func @transform_4(%arg0: i32, %arg1: i32) -> (i32, i32) {
    %c0_i32 = arith.constant 0 : i32
    %c0_i32_0 = arith.constant 0 : i32
    %c0_i32_1 = arith.constant 0 : i32
    return %c0_i32, %c0_i32_0 : i32, i32
  }
  func.func @transform_5(%arg0: i32, %arg1: i32) -> (i32, i32) {
    %c0_i32 = arith.constant 0 : i32
    %c0_i32_0 = arith.constant 0 : i32
    return %arg0, %c0_i32 : i32, i32
  }
}

</mosaic_0001>

<llo_original>
// kernel: tpu_custom_call.1
$region0: #{tpu_custom_call.1}
  #allocation0 [shape = 'u32[]', space=smem, size = 0x4, offset = 0x4, fixed_abs, tag = 'smem constant byte address 0x4 - core index']
  #allocation1 [shape = 'u32[144,128]{1,0:T(1,128)}', space=vmem, size = 0x12000, scoped, tag = 'internal scratch']
  #allocation2 [shape = 'f32[128,32]{1,0:T(8,128)}', space=vmem, size = 0x10000, scoped, tag = 'scratch operand']
  %s0 = inlined_call_operand.vmem [shape: bf16[256,256], index: 0, kind: input, shape index: {}]
  %s1 = inlined_call_operand.vmem [shape: bf16[256,32], index: 1, kind: input, shape index: {}]
  %s2 = inlined_call_operand.vmem [shape: f32[256,32], index: 2, kind: input, shape index: {}]
  %s3 = inlined_call_operand.vmem [shape: f32[32,128], index: 3, kind: input, shape index: {}]
  %s4 = inlined_call_operand.vmem [shape: f32[1,128], index: 4, kind: input, shape index: {}]
  %s5 = inlined_call_operand.hbm [shape: f32[256,128], index: 5, kind: output, shape index: {}]
  %s6 = sld [smem:[#allocation0]]
  $region102: #{tpu_custom_call.1} parent=0
    _
  %s8 = ssub.s32 1, %s6
  %s9 = scalar_select 0, %s8, %s6
  $region1: #{tpu_custom_call.1} parent=0
    #allocation3 [shape = 'u8[65536]{0}', space=vmem, size = 0x10000, scoped, tag = 'input window, operand 0']
    #allocation4 [shape = 'u8[131072]{0}', space=vmem, size = 0x20000, scoped, tag = 'output window, operand 0']
    #allocation5 [shape = 's32[2]{0}', space=sflag, size = 0x8, scoped, tag = 'scoped memory for tpu_custom_call.1']
    %10 = vsyncpa [#allocation5], 0
    %s11 = scalar_lea.sflag [#allocation5], 1
    %12 = vsyncpa %s11, 0
    loop: start=0, step=1, limit=6
    $region2: #{tpu_custom_call.1} parent=1 // loop_pre_header
      _
    $region3: #{tpu_custom_call.1} parent=1 // loop_header
      %s14 = sphi 0, %s18
      %p15 = scmp.ge.s32.totalorder %s14, 6
      %s21 = sphi 0, %s33
      %s22 = sphi 0, %s29
      %s23 = sphi 0, %s21
      %s24 = sphi 0, %s22
      %s25 = sphi 0, %s23
      %s26 = sphi 0, %s24
      %s38 = sphi 0, %s40
      %s41 = sphi 0, %s38
      %s42 = sphi 0, %s41
      %s58 = sphi 0, %s42
      %s64 = sphi 0, %s66
      %s67 = sphi 0, %s64
      %s68 = sphi 0, %s67
      %s84 = sphi 0, %s68
      %s90 = sphi 0, %s92
      %s93 = sphi 0, %s90
      %s94 = sphi 0, %s93
      %s110 = sphi 0, %s94
      %s114 = sphi 0, %s114
      %s116 = sphi 0, %s114
      %s117 = sphi 0, %s116
      %s131 = sphi 0, %s117
      %s135 = sphi 0, %s135
      %s137 = sphi 0, %s135
      %s138 = sphi 0, %s137
      %s152 = sphi 0, %s138
      %s158 = sphi 0, %s160
      %s161 = sphi 0, %s158
      %s162 = sphi 0, %s161
      %s178 = sphi 0, %s162
    $region4: #{tpu_custom_call.1} parent=1 // loop_header_branch
      %17 = sbr.rel (%p15) target = $region8
    $region5: #{tpu_custom_call.1} parent=1 // loop_body
      %s19 = ssub.s32 %s14, 1
      %s20 = ssub.s32 %s14, 2
      %s27 = sadd.s32 1, %s22
      %p28 = scmp.ge.s32.totalorder %s27, 2
      %s29 = scalar_select %p28, 0, %s27
      %s30 = sadd.s32 1, %s21
      %s31 = scalar_select %p28, %s30, %s21
      %p32 = scmp.ge.s32.totalorder %s31, 2
      %s33 = scalar_select %p32, 0, %s31
      %s34 = ssub.s32 %s21, %s33
      %s35 = ssub.s32 %s22, %s29
      %s36 = sor.u32 %s34, %s35
      %p37 = scmp.eq.s32.totalorder %s36, 0
      %s39 = sadd.s32 %s38, 1
      %s40 = scalar_select %p37, %s38, %s39
      %p43 = pneg %p37
      %p44 = scmp.eq.s32.totalorder %s14, 3
      %p45 = por %p43, %p44
      %p46 = scmp.ne.s32.totalorder %s38, %s41
      %p47 = scmp.eq.s32.totalorder %s14, 0
      %p48 = por %p46, %p47
      %p49 = scmp.ne.s32.totalorder %s38, %s41
      %p50 = scmp.eq.s32.totalorder %s19, 3
      %p51 = por %p49, %p50
      %p52 = scmp.ne.s32.totalorder %s41, %s42
      %p53 = scmp.eq.s32.totalorder %s19, 0
      %p54 = por %p52, %p53
      %p55 = scmp.ne.s32.totalorder %s41, %s42
      %p56 = scmp.eq.s32.totalorder %s20, 3
      %p57 = por %p55, %p56
      %p59 = scmp.ne.s32.totalorder %s42, %s58
      %p60 = scmp.eq.s32.totalorder %s20, 0
      %p61 = por %p59, %p60
      %s62 = ssub.s32 %s22, %s29
      %p63 = scmp.eq.s32.totalorder %s62, 0
      %s65 = sadd.s32 %s64, 1
      %s66 = scalar_select %p63, %s64, %s65
      %p69 = pneg %p63
      %p70 = scmp.eq.s32.totalorder %s14, 3
      %p71 = por %p69, %p70
      %p72 = scmp.ne.s32.totalorder %s64, %s67
      %p73 = scmp.eq.s32.totalorder %s14, 0
      %p74 = por %p72, %p73
      %p75 = scmp.ne.s32.totalorder %s64, %s67
      %p76 = scmp.eq.s32.totalorder %s19, 3
      %p77 = por %p75, %p76
      %p78 = scmp.ne.s32.totalorder %s67, %s68
      %p79 = scmp.eq.s32.totalorder %s19, 0
      %p80 = por %p78, %p79
      %p81 = scmp.ne.s32.totalorder %s67, %s68
      %p82 = scmp.eq.s32.totalorder %s20, 3
      %p83 = por %p81, %p82
      %p85 = scmp.ne.s32.totalorder %s68, %s84
      %p86 = scmp.eq.s32.totalorder %s20, 0
      %p87 = por %p85, %p86
      %s88 = ssub.s32 %s21, %s33
      %p89 = scmp.eq.s32.totalorder %s88, 0
      %s91 = sadd.s32 %s90, 1
      %s92 = scalar_select %p89, %s90, %s91
      %p95 = pneg %p89
      %p96 = scmp.eq.s32.totalorder %s14, 3
      %p97 = por %p95, %p96
      %p98 = scmp.ne.s32.totalorder %s90, %s93
      %p99 = scmp.eq.s32.totalorder %s14, 0
      %p100 = por %p98, %p99
      %p101 = scmp.ne.s32.totalorder %s90, %s93
      %p102 = scmp.eq.s32.totalorder %s19, 3
      %p103 = por %p101, %p102
      %p104 = scmp.ne.s32.totalorder %s93, %s94
      %p105 = scmp.eq.s32.totalorder %s19, 0
      %p106 = por %p104, %p105
      %p107 = scmp.ne.s32.totalorder %s93, %s94
      %p108 = scmp.eq.s32.totalorder %s20, 3
      %p109 = por %p107, %p108
      %p111 = scmp.ne.s32.totalorder %s94, %s110
      %p112 = scmp.eq.s32.totalorder %s20, 0
      %p113 = por %p111, %p112
      %s115 = sadd.s32 %s114, 1
      %p118 = scmp.eq.s32.totalorder %s14, 3
      %p119 = scmp.ne.s32.totalorder %s114, %s116
      %p120 = scmp.eq.s32.totalorder %s14, 0
      %p121 = por %p119, %p120
      %p122 = scmp.ne.s32.totalorder %s114, %s116
      %p123 = scmp.eq.s32.totalorder %s19, 3
      %p124 = por %p122, %p123
      %p125 = scmp.ne.s32.totalorder %s116, %s117
      %p126 = scmp.eq.s32.totalorder %s19, 0
      %p127 = por %p125, %p126
      %p128 = scmp.ne.s32.totalorder %s116, %s117
      %p129 = scmp.eq.s32.totalorder %s20, 3
      %p130 = por %p128, %p129
      %p132 = scmp.ne.s32.totalorder %s117, %s131
      %p133 = scmp.eq.s32.totalorder %s20, 0
      %p134 = por %p132, %p133
      %s136 = sadd.s32 %s135, 1
      %p139 = scmp.eq.s32.totalorder %s14, 3
      %p140 = scmp.ne.s32.totalorder %s135, %s137
      %p141 = scmp.eq.s32.totalorder %s14, 0
      %p142 = por %p140, %p141
      %p143 = scmp.ne.s32.totalorder %s135, %s137
      %p144 = scmp.eq.s32.totalorder %s19, 3
      %p145 = por %p143, %p144
      %p146 = scmp.ne.s32.totalorder %s137, %s138
      %p147 = scmp.eq.s32.totalorder %s19, 0
      %p148 = por %p146, %p147
      %p149 = scmp.ne.s32.totalorder %s137, %s138
      %p150 = scmp.eq.s32.totalorder %s20, 3
      %p151 = por %p149, %p150
      %p153 = scmp.ne.s32.totalorder %s138, %s152
      %p154 = scmp.eq.s32.totalorder %s20, 0
      %p155 = por %p153, %p154
      %s156 = ssub.s32 %s21, %s33
      %p157 = scmp.eq.s32.totalorder %s156, 0
      %s159 = sadd.s32 %s158, 1
      %s160 = scalar_select %p157, %s158, %s159
      %p163 = pneg %p157
      %p164 = scmp.eq.s32.totalorder %s14, 3
      %p165 = por %p163, %p164
      %p166 = scmp.ne.s32.totalorder %s158, %s161
      %p167 = scmp.eq.s32.totalorder %s14, 0
      %p168 = por %p166, %p167
      %p169 = scmp.ne.s32.totalorder %s158, %s161
      %p170 = scmp.eq.s32.totalorder %s19, 3
      %p171 = por %p169, %p170
      %p172 = scmp.ne.s32.totalorder %s161, %s162
      %p173 = scmp.eq.s32.totalorder %s19, 0
      %p174 = por %p172, %p173
      %p175 = scmp.ne.s32.totalorder %s161, %s162
      %p176 = scmp.eq.s32.totalorder %s20, 3
      %p177 = por %p175, %p176
      %p179 = scmp.ne.s32.totalorder %s162, %s178
      %p180 = scmp.eq.s32.totalorder %s20, 0
      %p181 = por %p179, %p180
      %p182 = scmp.le.s32.totalorder 1, %s14
      %p183 = scmp.lt.s32.totalorder %s14, 5
      %p184 = pnand %p182, %p183
      %p185 = pneg %p184
      // Predicated region
      $region9: #{tpu_custom_call.1} parent=5 // pred_check
        _
      $region10: #{tpu_custom_call.1} parent=5 // pred_check_branch
        %187 = sbr.rel (%p184) target = $region12
      $region11: #{tpu_custom_call.1} parent=5 // pred_region
        %s188 = ssub.s32 %s14, 1
        // Predicated region
        $region13: #{tpu_custom_call.1} parent=11 // pred_check
          %p189 = pneg %p127
        $region14: #{tpu_custom_call.1} parent=11 // pred_check_branch
          %191 = sbr.rel (%p189) target = $region16
        $region15: #{tpu_custom_call.1} parent=11 // pred_region
          _
        $region16: #{tpu_custom_call.1} parent=11 // pred_fallthru
          _
        // Predicated region
        $region17: #{tpu_custom_call.1} parent=11 // pred_check
          %p192 = pneg %p148
        $region18: #{tpu_custom_call.1} parent=11 // pred_check_branch
          %194 = sbr.rel (%p192) target = $region20
        $region19: #{tpu_custom_call.1} parent=11 // pred_region
          _
        $region20: #{tpu_custom_call.1} parent=11 // pred_fallthru
          _
      $region12: #{tpu_custom_call.1} parent=5 // pred_fallthru
        _
      %p195 = scmp.lt.s32.totalorder %s14, 4
      // Predicated region
      $region21: #{tpu_custom_call.1} parent=5 // pred_check
        %p196 = pneg %p195
      $region22: #{tpu_custom_call.1} parent=5 // pred_check_branch
        %198 = sbr.rel (%p196) target = $region24
      $region23: #{tpu_custom_call.1} parent=5 // pred_region
        // Predicated region
        $region25: #{tpu_custom_call.1} parent=23 // pred_check
          %p199 = pneg %p48
        $region26: #{tpu_custom_call.1} parent=23 // pred_check_branch
          %201 = sbr.rel (%p199) target = $region28
        $region27: #{tpu_custom_call.1} parent=23 // pred_region
          %s202 = sand.u32 %s38, 1
          %s203 = sand.u32 %s38, 1
          %s204 = smul.addr %s203, 64
          %s205 = scalar_lea.vmem [#allocation3], %s204
          %s206 = smul.u32 16, %s21
          %s207 = smul.addr %s206, 2
          %s208 = sadd.s32 %s22, %s207
          %s209 = smul.addr %s208, 4
          %s210 = scalar_lea.vmem %s0, %s209
          // Predicated region
          $region29: #{tpu_custom_call.1} parent=27 // pred_check
            _
          $region30: #{tpu_custom_call.1} parent=27 // pred_check_branch
            %212 = sbr.rel (0) target = $region32
          $region31: #{tpu_custom_call.1} parent=27 // pred_region
            // Predicated region
            $region33: #{tpu_custom_call.1} parent=31 // pred_check
              _
            $region34: #{tpu_custom_call.1} parent=31 // pred_check_branch
              %214 = sbr.rel target = $region36
            $region35: #{tpu_custom_call.1} parent=31 // pred_region
              // Predicated region
              $region48: #{tpu_custom_call.1} parent=35 // pred_check
                _
              $region49: #{tpu_custom_call.1} parent=35 // pred_check_branch
                %260 = sbr.rel (0) target = $region51
              $region50: #{tpu_custom_call.1} parent=35 // pred_region
                loop: start=0, step=1, limit=1
                $region52: #{tpu_custom_call.1} parent=50 // loop_pre_header
                  _
                $region53: #{tpu_custom_call.1} parent=50 // loop_header
                  %s262 = sphi 0, %s266
                  %p263 = scmp.ge.s32.totalorder %s262, 1
                  %s267 = sphi %s210, %s210
                  %s268 = sphi %s205, %s205
                $region54: #{tpu_custom_call.1} parent=50 // loop_header_branch
                  %265 = sbr.rel (%p263) target = $region58
                $region55: #{tpu_custom_call.1} parent=50 // loop_body
                  _
                $region56: #{tpu_custom_call.1} parent=50 // loop_footer
                  %s266 = sadd.s32 1, %s262
                $region57: #{tpu_custom_call.1} parent=50 // loop_footer_branch
                  %261 = sbr.rel target = $region53
                $region58: #{tpu_custom_call.1} parent=50 // loop_exit
                  _
                %s270 = ssub.s32 16, 1
                loop: start=0, step=1, limit=1
                $region59: #{tpu_custom_call.1} parent=50 // loop_pre_header
                  _
                $region60: #{tpu_custom_call.1} parent=50 // loop_header
                  %s272 = sphi 0, %s276
                  %p273 = scmp.ge.s32.totalorder %s272, 1
                  %s277 = sphi %s210, %s210
                  %s278 = sphi %s205, %s205
                $region61: #{tpu_custom_call.1} parent=50 // loop_header_branch
                  %275 = sbr.rel (%p273) target = $region65
                $region62: #{tpu_custom_call.1} parent=50 // loop_body
                  %v279 = vld [vmem:[%s277] sm:%s270]
                  %280 = vst [vmem:[%s278] sm:%s270] %v279
                  %v281 = vld [vmem:[%s277 + $0x8] sm:%s270]
                  %282 = vst [vmem:[%s278 + $0x4] sm:%s270] %v281
                  %v283 = vld [vmem:[%s277 + $0x10] sm:%s270]
                  %284 = vst [vmem:[%s278 + $0x8] sm:%s270] %v283
                  %v285 = vld [vmem:[%s277 + $0x18] sm:%s270]
                  %286 = vst [vmem:[%s278 + $0xc] sm:%s270] %v285
                  %v287 = vld [vmem:[%s277 + $0x20] sm:%s270]
                  %288 = vst [vmem:[%s278 + $0x10] sm:%s270] %v287
                  %v289 = vld [vmem:[%s277 + $0x28] sm:%s270]
                  %290 = vst [vmem:[%s278 + $0x14] sm:%s270] %v289
                  %v291 = vld [vmem:[%s277 + $0x30] sm:%s270]
                  %292 = vst [vmem:[%s278 + $0x18] sm:%s270] %v291
                  %v293 = vld [vmem:[%s277 + $0x38] sm:%s270]
                  %294 = vst [vmem:[%s278 + $0x1c] sm:%s270] %v293
                  %v295 = vld [vmem:[%s277 + $0x40] sm:%s270]
                  %296 = vst [vmem:[%s278 + $0x20] sm:%s270] %v295
                  %v297 = vld [vmem:[%s277 + $0x48] sm:%s270]
                  %298 = vst [vmem:[%s278 + $0x24] sm:%s270] %v297
                  %v299 = vld [vmem:[%s277 + $0x50] sm:%s270]
                  %300 = vst [vmem:[%s278 + $0x28] sm:%s270] %v299
                  %v301 = vld [vmem:[%s277 + $0x58] sm:%s270]
                  %302 = vst [vmem:[%s278 + $0x2c] sm:%s270] %v301
                  %v303 = vld [vmem:[%s277 + $0x60] sm:%s270]
                  %304 = vst [vmem:[%s278 + $0x30] sm:%s270] %v303
                  %v305 = vld [vmem:[%s277 + $0x68] sm:%s270]
                  %306 = vst [vmem:[%s278 + $0x34] sm:%s270] %v305
                  %v307 = vld [vmem:[%s277 + $0x70] sm:%s270]
                  %308 = vst [vmem:[%s278 + $0x38] sm:%s270] %v307
                  %v309 = vld [vmem:[%s277 + $0x78] sm:%s270]
                  %310 = vst [vmem:[%s278 + $0x3c] sm:%s270] %v309
                $region63: #{tpu_custom_call.1} parent=50 // loop_footer
                  %s276 = sadd.s32 1, %s272
                $region64: #{tpu_custom_call.1} parent=50 // loop_footer_branch
                  %271 = sbr.rel target = $region60
                $region65: #{tpu_custom_call.1} parent=50 // loop_exit
                  _
              $region51: #{tpu_custom_call.1} parent=35 // pred_fallthru
                _
            $region36: #{tpu_custom_call.1} parent=31 // pred_fallthru
              _
            // Predicated region
            $region37: #{tpu_custom_call.1} parent=31 // pred_check
              _
            $region38: #{tpu_custom_call.1} parent=31 // pred_check_branch
              %216 = sbr.rel (0) target = $region40
            $region39: #{tpu_custom_call.1} parent=31 // pred_region
              %s218 = ssub.s32 16, 1
              loop: start=0, step=1, limit=1
              $region41: #{tpu_custom_call.1} parent=39 // loop_pre_header
                _
              $region42: #{tpu_custom_call.1} parent=39 // loop_header
                %s220 = sphi 0, %s224
                %p221 = scmp.ge.s32.totalorder %s220, 1
                %s225 = sphi %s210, %s210
                %s226 = sphi %s205, %s205
              $region43: #{tpu_custom_call.1} parent=39 // loop_header_branch
                %223 = sbr.rel (%p221) target = $region47
              $region44: #{tpu_custom_call.1} parent=39 // loop_body
                %v227 = vld [vmem:[%s225] sm:%s218]
                %228 = vst [vmem:[%s226] sm:%s218] %v227
                %v229 = vld [vmem:[%s225 + $0x8] sm:%s218]
                %230 = vst [vmem:[%s226 + $0x4] sm:%s218] %v229
                %v231 = vld [vmem:[%s225 + $0x10] sm:%s218]
                %232 = vst [vmem:[%s226 + $0x8] sm:%s218] %v231
                %v233 = vld [vmem:[%s225 + $0x18] sm:%s218]
                %234 = vst [vmem:[%s226 + $0xc] sm:%s218] %v233
                %v235 = vld [vmem:[%s225 + $0x20] sm:%s218]
                %236 = vst [vmem:[%s226 + $0x10] sm:%s218] %v235
                %v237 = vld [vmem:[%s225 + $0x28] sm:%s218]
                %238 = vst [vmem:[%s226 + $0x14] sm:%s218] %v237
                %v239 = vld [vmem:[%s225 + $0x30] sm:%s218]
                %240 = vst [vmem:[%s226 + $0x18] sm:%s218] %v239
                %v241 = vld [vmem:[%s225 + $0x38] sm:%s218]
                %242 = vst [vmem:[%s226 + $0x1c] sm:%s218] %v241
                %v243 = vld [vmem:[%s225 + $0x40] sm:%s218]
                %244 = vst [vmem:[%s226 + $0x20] sm:%s218] %v243
                %v245 = vld [vmem:[%s225 + $0x48] sm:%s218]
                %246 = vst [vmem:[%s226 + $0x24] sm:%s218] %v245
                %v247 = vld [vmem:[%s225 + $0x50] sm:%s218]
                %248 = vst [vmem:[%s226 + $0x28] sm:%s218] %v247
                %v249 = vld [vmem:[%s225 + $0x58] sm:%s218]
                %250 = vst [vmem:[%s226 + $0x2c] sm:%s218] %v249
                %v251 = vld [vmem:[%s225 + $0x60] sm:%s218]
                %252 = vst [vmem:[%s226 + $0x30] sm:%s218] %v251
                %v253 = vld [vmem:[%s225 + $0x68] sm:%s218]
                %254 = vst [vmem:[%s226 + $0x34] sm:%s218] %v253
                %v255 = vld [vmem:[%s225 + $0x70] sm:%s218]
                %256 = vst [vmem:[%s226 + $0x38] sm:%s218] %v255
                %v257 = vld [vmem:[%s225 + $0x78] sm:%s218]
                %258 = vst [vmem:[%s226 + $0x3c] sm:%s218] %v257
              $region45: #{tpu_custom_call.1} parent=39 // loop_footer
                %s224 = sadd.s32 1, %s220
              $region46: #{tpu_custom_call.1} parent=39 // loop_footer_branch
                %219 = sbr.rel target = $region42
              $region47: #{tpu_custom_call.1} parent=39 // loop_exit
                _
            $region40: #{tpu_custom_call.1} parent=31 // pred_fallthru
              _
          $region32: #{tpu_custom_call.1} parent=27 // pred_fallthru
            _
          %311 = vnop
        $region28: #{tpu_custom_call.1} parent=23 // pred_fallthru
          _
        // Predicated region
        $region66: #{tpu_custom_call.1} parent=23 // pred_check
          %p312 = pneg %p74
        $region67: #{tpu_custom_call.1} parent=23 // pred_check_branch
          %314 = sbr.rel (%p312) target = $region69
        $region68: #{tpu_custom_call.1} parent=23 // pred_region
          %s315 = smul.u32 16, %s22
          %p316 = scmp.lt.s32.totalorder %s315, 31
          %s317 = scalar_select %p316, %s315, 31
          %s318 = smul.addr %s317, 4
          %s319 = scalar_lea.vmem %s1, %s318
          %s320 = smul.u32 16, %s22
        $region69: #{tpu_custom_call.1} parent=23 // pred_fallthru
          _
        // Predicated region
        $region70: #{tpu_custom_call.1} parent=23 // pred_check
          %p321 = pneg %p100
        $region71: #{tpu_custom_call.1} parent=23 // pred_check_branch
          %323 = sbr.rel (%p321) target = $region73
        $region72: #{tpu_custom_call.1} parent=23 // pred_region
          %s324 = smul.u32 16, %s21
          %p325 = scmp.lt.s32.totalorder %s324, 31
          %s326 = scalar_select %p325, %s324, 31
          %s327 = smul.addr %s326, 8
          %s328 = scalar_lea.vmem %s2, %s327
          %s329 = smul.u32 16, %s21
        $region73: #{tpu_custom_call.1} parent=23 // pred_fallthru
          _
      $region24: #{tpu_custom_call.1} parent=5 // pred_fallthru
        _
      %p330 = scmp.le.s32.totalorder 1, %s14
      %p331 = scmp.lt.s32.totalorder %s14, 5
      %p332 = pnand %p330, %p331
      %p333 = pneg %p332
      // Predicated region
      $region74: #{tpu_custom_call.1} parent=5 // pred_check
        _
      $region75: #{tpu_custom_call.1} parent=5 // pred_check_branch
        %335 = sbr.rel (%p332) target = $region77
      $region76: #{tpu_custom_call.1} parent=5 // pred_region
        %s336 = ssub.s32 %s14, 1
        %s337 = sand.u32 %s41, 1
        %s338 = sand.u32 %s41, 1
        %s339 = smul.addr %s338, 64
        %s340 = scalar_lea.vmem [#allocation3], %s339
        // Predicated region
        $region78: #{tpu_custom_call.1} parent=76 // pred_check
          %p341 = pneg %p54
        $region79: #{tpu_custom_call.1} parent=76 // pred_check_branch
          %343 = sbr.rel (%p341) target = $region81
        $region80: #{tpu_custom_call.1} parent=76 // pred_region
          _
        $region81: #{tpu_custom_call.1} parent=76 // pred_fallthru
          _
        %s344 = sand.u32 %s41, 1
        %s345 = sand.u32 %s41, 1
        %s346 = smul.addr %s345, 64
        %s347 = scalar_lea.vmem [#allocation3], %s346
        %p348 = pneg %p54
        %p349 = pneg %p51
        %s350 = smul.u32 16, %s24
        %p351 = scmp.lt.s32.totalorder %s350, 31
        %s352 = scalar_select %p351, %s350, 31
        %s353 = smul.addr %s352, 4
        %s354 = scalar_lea.vmem %s1, %s353
        %p355 = pneg %p80
        %p356 = pneg %p77
        %s357 = smul.u32 16, %s23
        %p358 = scmp.lt.s32.totalorder %s357, 31
        %s359 = scalar_select %p358, %s357, 31
        %s360 = smul.addr %s359, 8
        %s361 = scalar_lea.vmem %s2, %s360
        %p362 = pneg %p106
        %p363 = pneg %p103
        %p364 = pneg %p127
        %p365 = pneg %p124
        %p366 = pneg %p148
        %p367 = pneg %p145
        %p368 = pneg %p174
        %p369 = pneg %p171
        %s370 = sand.u32 %s161, 1
        %s371 = scalar_lea.sflag [#allocation5], %s370
        %s372 = sand.u32 %s161, 1
        %s373 = smul.addr %s372, 128
        %s374 = scalar_lea.vmem [#allocation4], %s373
        %s375 = smul.u32 16, %s23
        %s376 = smul.u32 16, %s24
        %p377 = scmp.lt.s32.totalorder %s376, 31
        %s378 = scalar_select %p377, %s376, 31
        %s379 = smul.addr %s378, 4
        %s380 = scalar_lea.vmem %s1, %s379
        %s381 = smul.u32 16, %s24
        %s382 = smul.u32 16, %s23
        %p383 = scmp.lt.s32.totalorder %s382, 31
        %s384 = scalar_select %p383, %s382, 31
        %s385 = smul.addr %s384, 8
        %s386 = scalar_lea.vmem %s2, %s385
        %s387 = smul.u32 16, %s23
        %s388 = smul.u32 16, %s23
        %p390 = scmp.eq.s32.totalorder %s24, 0
        // Predicated region
        $region82: #{tpu_custom_call.1} parent=76 // pred_check
          %p391 = pneg %p390
        $region83: #{tpu_custom_call.1} parent=76 // pred_check_branch
          %393 = sbr.rel (%p391) target = $region85
        $region84: #{tpu_custom_call.1} parent=76 // pred_region
          %vm394 = vcmask 261120
          %395 = vst.msk [vmem:[#allocation2] sm:$0xff] %vm394, 0.0
          %396 = vst.msk [vmem:[#allocation2 + $0x8] sm:$0xff] %vm394, 0.0
          %397 = vst.msk [vmem:[#allocation2 + $0x10] sm:$0xff] %vm394, 0.0
          %398 = vst.msk [vmem:[#allocation2 + $0x18] sm:$0xff] %vm394, 0.0
          %399 = vst.msk [vmem:[#allocation2 + $0x20] sm:$0xff] %vm394, 0.0
          %400 = vst.msk [vmem:[#allocation2 + $0x28] sm:$0xff] %vm394, 0.0
          %401 = vst.msk [vmem:[#allocation2 + $0x30] sm:$0xff] %vm394, 0.0
          %402 = vst.msk [vmem:[#allocation2 + $0x38] sm:$0xff] %vm394, 0.0
          %403 = vst.msk [vmem:[#allocation2 + $0x40] sm:$0xff] %vm394, 0.0
          %404 = vst.msk [vmem:[#allocation2 + $0x48] sm:$0xff] %vm394, 0.0
          %405 = vst.msk [vmem:[#allocation2 + $0x50] sm:$0xff] %vm394, 0.0
          %406 = vst.msk [vmem:[#allocation2 + $0x58] sm:$0xff] %vm394, 0.0
          %407 = vst.msk [vmem:[#allocation2 + $0x60] sm:$0xff] %vm394, 0.0
          %408 = vst.msk [vmem:[#allocation2 + $0x68] sm:$0xff] %vm394, 0.0
          %409 = vst.msk [vmem:[#allocation2 + $0x70] sm:$0xff] %vm394, 0.0
          %410 = vst.msk [vmem:[#allocation2 + $0x78] sm:$0xff] %vm394, 0.0
        $region85: #{tpu_custom_call.1} parent=76 // pred_fallthru
          _
        %v411 = vld [vmem:[%s340] sm:$0xf]
        %v412 = vld [vmem:[%s340 + $0x4] sm:$0xf]
        %v413 = vld [vmem:[%s340 + $0x8] sm:$0xf]
        %v414 = vld [vmem:[%s340 + $0xc] sm:$0xf]
        %v415 = vld [vmem:[%s340 + $0x10] sm:$0xf]
        %v416 = vld [vmem:[%s340 + $0x14] sm:$0xf]
        %v417 = vld [vmem:[%s340 + $0x18] sm:$0xf]
        %v418 = vld [vmem:[%s340 + $0x1c] sm:$0xf]
        %v419 = vld [vmem:[%s340 + $0x20] sm:$0xf]
        %v420 = vld [vmem:[%s340 + $0x24] sm:$0xf]
        %v421 = vld [vmem:[%s340 + $0x28] sm:$0xf]
        %v422 = vld [vmem:[%s340 + $0x2c] sm:$0xf]
        %v423 = vld [vmem:[%s340 + $0x30] sm:$0xf]
        %v424 = vld [vmem:[%s340 + $0x34] sm:$0xf]
        %v425 = vld [vmem:[%s340 + $0x38] sm:$0xf]
        %v426 = vld [vmem:[%s340 + $0x3c] sm:$0xf]
        %v427 = vunpack.c.l.bf16 %v411
        %v428 = vunpack.c.l.bf16 %v412
        %v429 = vunpack.c.l.bf16 %v413
        %v430 = vunpack.c.l.bf16 %v414
        %v431 = vunpack.c.l.bf16 %v415
        %v432 = vunpack.c.l.bf16 %v416
        %v433 = vunpack.c.l.bf16 %v417
        %v434 = vunpack.c.l.bf16 %v418
        %v435 = vunpack.c.l.bf16 %v419
        %v436 = vunpack.c.l.bf16 %v420
        %v437 = vunpack.c.l.bf16 %v421
        %v438 = vunpack.c.l.bf16 %v422
        %v439 = vunpack.c.l.bf16 %v423
        %v440 = vunpack.c.l.bf16 %v424
        %v441 = vunpack.c.l.bf16 %v425
        %v442 = vunpack.c.l.bf16 %v426
        %v443 = vmul.f32 %v427, %v427
        %v444 = vmul.f32 %v428, %v428
        %v445 = vmul.f32 %v429, %v429
        %v446 = vmul.f32 %v430, %v430
        %v447 = vmul.f32 %v431, %v431
        %v448 = vmul.f32 %v432, %v432
        %v449 = vmul.f32 %v433, %v433
        %v450 = vmul.f32 %v434, %v434
        %v451 = vmul.f32 %v435, %v435
        %v452 = vmul.f32 %v436, %v436
        %v453 = vmul.f32 %v437, %v437
        %v454 = vmul.f32 %v438, %v438
        %v455 = vmul.f32 %v439, %v439
        %v456 = vmul.f32 %v440, %v440
        %v457 = vmul.f32 %v441, %v441
        %v458 = vmul.f32 %v442, %v442
        %v459 = vpack.c.bf16 %v444, %v443
        %v460 = vpack.c.bf16 %v446, %v445
        %v461 = vpack.c.bf16 %v448, %v447
        %v462 = vpack.c.bf16 %v450, %v449
        %v463 = vpack.c.bf16 %v452, %v451
        %v464 = vpack.c.bf16 %v454, %v453
        %v465 = vpack.c.bf16 %v456, %v455
        %v466 = vpack.c.bf16 %v458, %v457
        %v467 = vld [vmem:[#allocation2] sm:$0xff]
        %v468 = vld [vmem:[#allocation2 + $0x8] sm:$0xff]
        %v469 = vld [vmem:[#allocation2 + $0x10] sm:$0xff]
        %v470 = vld [vmem:[#allocation2 + $0x18] sm:$0xff]
        %v471 = vld [vmem:[#allocation2 + $0x20] sm:$0xff]
        %v472 = vld [vmem:[#allocation2 + $0x28] sm:$0xff]
        %v473 = vld [vmem:[#allocation2 + $0x30] sm:$0xff]
        %v474 = vld [vmem:[#allocation2 + $0x38] sm:$0xff]
        %v475 = vld [vmem:[#allocation2 + $0x40] sm:$0xff]
        %v476 = vld [vmem:[#allocation2 + $0x48] sm:$0xff]
        %v477 = vld [vmem:[#allocation2 + $0x50] sm:$0xff]
        %v478 = vld [vmem:[#allocation2 + $0x58] sm:$0xff]
        %v479 = vld [vmem:[#allocation2 + $0x60] sm:$0xff]
        %v480 = vld [vmem:[#allocation2 + $0x68] sm:$0xff]
        %v481 = vld [vmem:[#allocation2 + $0x70] sm:$0xff]
        %v482 = vld [vmem:[#allocation2 + $0x78] sm:$0xff]
        %v483 = vld [vmem:[%s380] sm:$0xf]
        %v484 = vld [vmem:[%s380 + $0x4] sm:$0xf]
        %v485 = vld [vmem:[%s380 + $0x8] sm:$0xf]
        %v486 = vld [vmem:[%s380 + $0xc] sm:$0xf]
        %v487 = vld [vmem:[%s380 + $0x10] sm:$0xf]
        %v488 = vld [vmem:[%s380 + $0x14] sm:$0xf]
        %v489 = vld [vmem:[%s380 + $0x18] sm:$0xf]
        %v490 = vld [vmem:[%s380 + $0x1c] sm:$0xf]
        %v491 = vld [vmem:[%s380 + $0x20] sm:$0xf]
        %v492 = vld [vmem:[%s380 + $0x24] sm:$0xf]
        %v493 = vld [vmem:[%s380 + $0x28] sm:$0xf]
        %v494 = vld [vmem:[%s380 + $0x2c] sm:$0xf]
        %v495 = vld [vmem:[%s380 + $0x30] sm:$0xf]
        %v496 = vld [vmem:[%s380 + $0x34] sm:$0xf]
        %v497 = vld [vmem:[%s380 + $0x38] sm:$0xf]
        %v498 = vld [vmem:[%s380 + $0x3c] sm:$0xf]
        %v515 = vunpack.c.l.b16 %v483
        %v516 = vunpack.c.l.b16 %v484
        %v517 = vunpack.c.l.b16 %v485
        %v518 = vunpack.c.l.b16 %v486
        %v519 = vunpack.c.l.b16 %v487
        %v520 = vunpack.c.l.b16 %v488
        %v521 = vunpack.c.l.b16 %v489
        %v522 = vunpack.c.l.b16 %v490
        %v523 = vunpack.c.l.b16 %v491
        %v524 = vunpack.c.l.b16 %v492
        %v525 = vunpack.c.l.b16 %v493
        %v526 = vunpack.c.l.b16 %v494
        %v527 = vunpack.c.l.b16 %v495
        %v528 = vunpack.c.l.b16 %v496
        %v529 = vunpack.c.l.b16 %v497
        %v530 = vunpack.c.l.b16 %v498
        %v531 = vpack.c.b16 %v516, %v515
        %v532 = vpack.c.b16 %v518, %v517
        %v533 = vpack.c.b16 %v520, %v519
        %v534 = vpack.c.b16 %v522, %v521
        %v535 = vpack.c.b16 %v524, %v523
        %v536 = vpack.c.b16 %v526, %v525
        %v537 = vpack.c.b16 %v528, %v527
        %v538 = vpack.c.b16 %v530, %v529
        %547 = vmatprep.subr.bf16.mxu0 0
        %548 = vmatpush1.bf16.msra.mxu0 %v538
        %549 = vmatprep.subr.bf16.mxu0 0
        %550 = vmatpush1.bf16.msra.mxu0 %v537
        %551 = vmatprep.subr.bf16.mxu0 0
        %552 = vmatpush1.bf16.msra.mxu0 %v536
        %553 = vmatprep.subr.bf16.mxu0 0
        %554 = vmatpush1.bf16.msra.mxu0 %v535
        %555 = vmatprep.subr.bf16.mxu0 0
        %556 = vmatpush1.bf16.msra.mxu0 %v534
        %557 = vmatprep.subr.bf16.mxu0 0
        %558 = vmatpush1.bf16.msra.mxu0 %v533
        %559 = vmatprep.subr.bf16.mxu0 0
        %560 = vmatpush1.bf16.msra.mxu0 %v532
        %561 = vmatprep.subr.bf16.mxu0 0
        %562 = vmatpush1.bf16.msra.mxu0 %v531
        %563 = vmatprep.subr.bf16.mxu0 0
        %564 = vmatpush2.bf16.msra.mxu0 0
        %565 = vmatprep.subr.bf16.mxu0 0
        %566 = vmatpush2.bf16.msra.mxu0 0
        %567 = vmatprep.subr.bf16.mxu0 0
        %568 = vmatpush2.bf16.msra.mxu0 0
        %569 = vmatprep.subr.bf16.mxu0 0
        %570 = vmatpush2.bf16.msra.mxu0 0
        %571 = vmatprep.subr.bf16.mxu0 0
        %572 = vmatpush2.bf16.msra.mxu0 0
        %573 = vmatprep.subr.bf16.mxu0 0
        %574 = vmatpush2.bf16.msra.mxu0 0
        %575 = vmatprep.subr.bf16.mxu0 0
        %576 = vmatpush2.bf16.msra.mxu0 0
        %577 = vmatprep.subr.bf16.mxu0 0
        %578 = vmatpush2.bf16.msra.mxu0 0
        %579 = vmatprep.mubr.bf16.mxu0 0
        %580 = vmatmul.mubr.bf16.gmra.mxu0 %v459
        %v581 = vpop.f32.mrf.mxu0
        %v582 = vadd.f32 0.0, %v581
        %v583 = vpop.f32.mrf.mxu0
        %v584 = vpop.f32.mrf.mxu0
        %v585 = vadd.f32 0.0, %v584
        %v586 = vpop.f32.mrf.mxu0
        %587 = vmatprep.mubr.bf16.mxu0 0
        %588 = vmatmul.mubr.bf16.gmra.mxu0 %v460
        %v589 = vpop.f32.mrf.mxu0
        %v590 = vadd.f32 0.0, %v589
        %v591 = vpop.f32.mrf.mxu0
        %v592 = vpop.f32.mrf.mxu0
        %v593 = vadd.f32 0.0, %v592
        %v594 = vpop.f32.mrf.mxu0
        %595 = vmatprep.mubr.bf16.mxu0 0
        %596 = vmatmul.mubr.bf16.gmra.mxu0 %v461
        %v597 = vpop.f32.mrf.mxu0
        %v598 = vadd.f32 0.0, %v597
        %v599 = vpop.f32.mrf.mxu0
        %v600 = vpop.f32.mrf.mxu0
        %v601 = vadd.f32 0.0, %v600
        %v602 = vpop.f32.mrf.mxu0
        %603 = vmatprep.mubr.bf16.mxu0 0
        %604 = vmatmul.mubr.bf16.gmra.mxu0 %v462
        %v605 = vpop.f32.mrf.mxu0
        %v606 = vadd.f32 0.0, %v605
        %v607 = vpop.f32.mrf.mxu0
        %v608 = vpop.f32.mrf.mxu0
        %v609 = vadd.f32 0.0, %v608
        %v610 = vpop.f32.mrf.mxu0
        %611 = vmatprep.mubr.bf16.mxu0 0
        %612 = vmatmul.mubr.bf16.gmra.mxu0 %v463
        %v613 = vpop.f32.mrf.mxu0
        %v614 = vadd.f32 0.0, %v613
        %v615 = vpop.f32.mrf.mxu0
        %v616 = vpop.f32.mrf.mxu0
        %v617 = vadd.f32 0.0, %v616
        %v618 = vpop.f32.mrf.mxu0
        %619 = vmatprep.mubr.bf16.mxu0 0
        %620 = vmatmul.mubr.bf16.gmra.mxu0 %v464
        %v621 = vpop.f32.mrf.mxu0
        %v622 = vadd.f32 0.0, %v621
        %v623 = vpop.f32.mrf.mxu0
        %v624 = vpop.f32.mrf.mxu0
        %v625 = vadd.f32 0.0, %v624
        %v626 = vpop.f32.mrf.mxu0
        %627 = vmatprep.mubr.bf16.mxu0 0
        %628 = vmatmul.mubr.bf16.gmra.mxu0 %v465
        %v629 = vpop.f32.mrf.mxu0
        %v630 = vadd.f32 0.0, %v629
        %v631 = vpop.f32.mrf.mxu0
        %v632 = vpop.f32.mrf.mxu0
        %v633 = vadd.f32 0.0, %v632
        %v634 = vpop.f32.mrf.mxu0
        %635 = vmatprep.mubr.bf16.mxu0 0
        %636 = vmatmul.mubr.bf16.gmra.mxu0 %v466
        %v637 = vpop.f32.mrf.mxu0
        %v638 = vadd.f32 0.0, %v637
        %v639 = vpop.f32.mrf.mxu0
        %v640 = vpop.f32.mrf.mxu0
        %v641 = vadd.f32 0.0, %v640
        %v642 = vpop.f32.mrf.mxu0
        %643 = vdwg.mxu0
        %v644 = vadd.f32 %v467, %v582
        %v645 = vadd.f32 %v468, %v585
        %v646 = vadd.f32 %v469, %v590
        %v647 = vadd.f32 %v470, %v593
        %v648 = vadd.f32 %v471, %v598
        %v649 = vadd.f32 %v472, %v601
        %v650 = vadd.f32 %v473, %v606
        %v651 = vadd.f32 %v474, %v609
        %v652 = vadd.f32 %v475, %v614
        %v653 = vadd.f32 %v476, %v617
        %v654 = vadd.f32 %v477, %v622
        %v655 = vadd.f32 %v478, %v625
        %v656 = vadd.f32 %v479, %v630
        %v657 = vadd.f32 %v480, %v633
        %v658 = vadd.f32 %v481, %v638
        %v659 = vadd.f32 %v482, %v641
        %vm660 = vcmask 261120
        %661 = vst.msk [vmem:[#allocation2] sm:$0xff] %vm660, %v644
        %662 = vst.msk [vmem:[#allocation2 + $0x8] sm:$0xff] %vm660, %v645
        %663 = vst.msk [vmem:[#allocation2 + $0x10] sm:$0xff] %vm660, %v646
        %664 = vst.msk [vmem:[#allocation2 + $0x18] sm:$0xff] %vm660, %v647
        %665 = vst.msk [vmem:[#allocation2 + $0x20] sm:$0xff] %vm660, %v648
        %666 = vst.msk [vmem:[#allocation2 + $0x28] sm:$0xff] %vm660, %v649
        %667 = vst.msk [vmem:[#allocation2 + $0x30] sm:$0xff] %vm660, %v650
        %668 = vst.msk [vmem:[#allocation2 + $0x38] sm:$0xff] %vm660, %v651
        %669 = vst.msk [vmem:[#allocation2 + $0x40] sm:$0xff] %vm660, %v652
        %670 = vst.msk [vmem:[#allocation2 + $0x48] sm:$0xff] %vm660, %v653
        %671 = vst.msk [vmem:[#allocation2 + $0x50] sm:$0xff] %vm660, %v654
        %672 = vst.msk [vmem:[#allocation2 + $0x58] sm:$0xff] %vm660, %v655
        %673 = vst.msk [vmem:[#allocation2 + $0x60] sm:$0xff] %vm660, %v656
        %674 = vst.msk [vmem:[#allocation2 + $0x68] sm:$0xff] %vm660, %v657
        %675 = vst.msk [vmem:[#allocation2 + $0x70] sm:$0xff] %vm660, %v658
        %676 = vst.msk [vmem:[#allocation2 + $0x78] sm:$0xff] %vm660, %v659
        %p677 = scmp.eq.s32.totalorder %s24, 1
        // Predicated region
        $region86: #{tpu_custom_call.1} parent=76 // pred_check
          %p678 = pneg %p677
        $region87: #{tpu_custom_call.1} parent=76 // pred_check_branch
          %680 = sbr.rel (%p678) target = $region89
        $region88: #{tpu_custom_call.1} parent=76 // pred_region
          %v681 = vld [vmem:[#allocation2] sm:$0xff]
          %v682 = vld [vmem:[#allocation2 + $0x8] sm:$0xff]
          %v683 = vld [vmem:[#allocation2 + $0x10] sm:$0xff]
          %v684 = vld [vmem:[#allocation2 + $0x18] sm:$0xff]
          %v685 = vld [vmem:[#allocation2 + $0x20] sm:$0xff]
          %v686 = vld [vmem:[#allocation2 + $0x28] sm:$0xff]
          %v687 = vld [vmem:[#allocation2 + $0x30] sm:$0xff]
          %v688 = vld [vmem:[#allocation2 + $0x38] sm:$0xff]
          %v689 = vld [vmem:[#allocation2 + $0x40] sm:$0xff]
          %v690 = vld [vmem:[#allocation2 + $0x48] sm:$0xff]
          %v691 = vld [vmem:[#allocation2 + $0x50] sm:$0xff]
          %v692 = vld [vmem:[#allocation2 + $0x58] sm:$0xff]
          %v693 = vld [vmem:[#allocation2 + $0x60] sm:$0xff]
          %v694 = vld [vmem:[#allocation2 + $0x68] sm:$0xff]
          %v695 = vld [vmem:[#allocation2 + $0x70] sm:$0xff]
          %v696 = vld [vmem:[#allocation2 + $0x78] sm:$0xff]
          %v697 = vmul.f32 %v681, 0.9
          %v698 = vmul.f32 %v682, 0.9
          %v699 = vmul.f32 %v683, 0.9
          %v700 = vmul.f32 %v684, 0.9
          %v701 = vmul.f32 %v685, 0.9
          %v702 = vmul.f32 %v686, 0.9
          %v703 = vmul.f32 %v687, 0.9
          %v704 = vmul.f32 %v688, 0.9
          %v705 = vmul.f32 %v689, 0.9
          %v706 = vmul.f32 %v690, 0.9
          %v707 = vmul.f32 %v691, 0.9
          %v708 = vmul.f32 %v692, 0.9
          %v709 = vmul.f32 %v693, 0.9
          %v710 = vmul.f32 %v694, 0.9
          %v711 = vmul.f32 %v695, 0.9
          %v712 = vmul.f32 %v696, 0.9
          %v713 = vld [vmem:[%s386] sm:$0xff]
          %v714 = vld [vmem:[%s386 + $0x8] sm:$0xff]
          %v715 = vld [vmem:[%s386 + $0x10] sm:$0xff]
          %v716 = vld [vmem:[%s386 + $0x18] sm:$0xff]
          %v717 = vld [vmem:[%s386 + $0x20] sm:$0xff]
          %v718 = vld [vmem:[%s386 + $0x28] sm:$0xff]
          %v719 = vld [vmem:[%s386 + $0x30] sm:$0xff]
          %v720 = vld [vmem:[%s386 + $0x38] sm:$0xff]
          %v721 = vld [vmem:[%s386 + $0x40] sm:$0xff]
          %v722 = vld [vmem:[%s386 + $0x48] sm:$0xff]
          %v723 = vld [vmem:[%s386 + $0x50] sm:$0xff]
          %v724 = vld [vmem:[%s386 + $0x58] sm:$0xff]
          %v725 = vld [vmem:[%s386 + $0x60] sm:$0xff]
          %v726 = vld [vmem:[%s386 + $0x68] sm:$0xff]
          %v727 = vld [vmem:[%s386 + $0x70] sm:$0xff]
          %v728 = vld [vmem:[%s386 + $0x78] sm:$0xff]
          %v729 = vmul.f32 %v713, 0.1
          %v730 = vmul.f32 %v714, 0.1
          %v731 = vmul.f32 %v715, 0.1
          %v732 = vmul.f32 %v716, 0.1
          %v733 = vmul.f32 %v717, 0.1
          %v734 = vmul.f32 %v718, 0.1
          %v735 = vmul.f32 %v719, 0.1
          %v736 = vmul.f32 %v720, 0.1
          %v737 = vmul.f32 %v721, 0.1
          %v738 = vmul.f32 %v722, 0.1
          %v739 = vmul.f32 %v723, 0.1
          %v740 = vmul.f32 %v724, 0.1
          %v741 = vmul.f32 %v725, 0.1
          %v742 = vmul.f32 %v726, 0.1
          %v743 = vmul.f32 %v727, 0.1
          %v744 = vmul.f32 %v728, 0.1
          %v745 = vadd.f32 %v697, %v729
          %v746 = vadd.f32 %v698, %v730
          %v747 = vadd.f32 %v699, %v731
          %v748 = vadd.f32 %v700, %v732
          %v749 = vadd.f32 %v701, %v733
          %v750 = vadd.f32 %v702, %v734
          %v751 = vadd.f32 %v703, %v735
          %v752 = vadd.f32 %v704, %v736
          %v753 = vadd.f32 %v705, %v737
          %v754 = vadd.f32 %v706, %v738
          %v755 = vadd.f32 %v707, %v739
          %v756 = vadd.f32 %v708, %v740
          %v757 = vadd.f32 %v709, %v741
          %v758 = vadd.f32 %v710, %v742
          %v759 = vadd.f32 %v711, %v743
          %v760 = vadd.f32 %v712, %v744
          %v761 = vld [vmem:[%s3] sm:$0xff]
          %v762 = vld [vmem:[%s3 + $0x8] sm:$0xff]
          %v763 = vld [vmem:[%s3 + $0x10] sm:$0xff]
          %v764 = vld [vmem:[%s3 + $0x18] sm:$0xff]
          %v765 = vld [vmem:[%s4] sm:$0x1]
          %v767 = vlaneseq
          %v768 = vshrl.u32 %v767, 7
          %v769 = vsub.s32 0, %v768
          %v770 = vrot.slane %v765, %v769
          %v773 = vsel %vm660, %v745, 0
          %v776 = vsel %vm660, %v746, 0
          %v779 = vsel %vm660, %v747, 0
          %v782 = vsel %vm660, %v748, 0
          %v785 = vsel %vm660, %v749, 0
          %v788 = vsel %vm660, %v750, 0
          %v791 = vsel %vm660, %v751, 0
          %v794 = vsel %vm660, %v752, 0
          %v797 = vsel %vm660, %v753, 0
          %v800 = vsel %vm660, %v754, 0
          %v803 = vsel %vm660, %v755, 0
          %v806 = vsel %vm660, %v756, 0
          %v809 = vsel %vm660, %v757, 0
          %v812 = vsel %vm660, %v758, 0
          %v815 = vsel %vm660, %v759, 0
          %v818 = vsel %vm660, %v760, 0
          %820 = vmatprep.subr.mxu0 0.0
          %821 = vmatpush1.msra.mxu0 0.0
          %822 = vmatprep.subr.mxu0 0.0
          %823 = vmatpush1.msra.mxu0 0.0
          %824 = vmatprep.subr.mxu0 0.0
          %825 = vmatpush1.msra.mxu0 0.0
          %826 = vmatprep.subr.mxu0 0.0
          %827 = vmatpush1.msra.mxu0 0.0
          %828 = vmatprep.subr.mxu0 0.0
          %829 = vmatpush1.msra.mxu0 0.0
          %830 = vmatprep.subr.mxu0 0.0
          %831 = vmatpush1.msra.mxu0 0.0
          %832 = vmatprep.subr.mxu0 0.0
          %833 = vmatpush1.msra.mxu0 0.0
          %834 = vmatprep.subr.mxu0 0.0
          %835 = vmatpush1.msra.mxu0 0.0
          %836 = vmatprep.subr.mxu0 0.0
          %837 = vmatpush1.msra.mxu0 0.0
          %838 = vmatprep.subr.mxu0 0.0
          %839 = vmatpush1.msra.mxu0 0.0
          %840 = vmatprep.subr.mxu0 0.0
          %841 = vmatpush1.msra.mxu0 0.0
          %842 = vmatprep.subr.mxu0 0.0
          %843 = vmatpush1.msra.mxu0 0.0
          %844 = vmatprep.subr.mxu0 0.0
          %845 = vmatpush1.msra.mxu0 %v764
          %846 = vmatprep.subr.mxu0 0.0
          %847 = vmatpush1.msra.mxu0 %v763
          %848 = vmatprep.subr.mxu0 0.0
          %849 = vmatpush1.msra.mxu0 %v762
          %850 = vmatprep.subr.mxu0 0.0
          %851 = vmatpush1.msra.mxu0 %v761
          %852 = vmatprep.subr.mxu0 0.0
          %853 = vmatpush2.msra.mxu0 0.0
          %854 = vmatprep.subr.mxu0 0.0
          %855 = vmatpush2.msra.mxu0 0.0
          %856 = vmatprep.subr.mxu0 0.0
          %857 = vmatpush2.msra.mxu0 0.0
          %858 = vmatprep.subr.mxu0 0.0
          %859 = vmatpush2.msra.mxu0 0.0
          %860 = vmatprep.subr.mxu0 0.0
          %861 = vmatpush2.msra.mxu0 0.0
          %862 = vmatprep.subr.mxu0 0.0
          %863 = vmatpush2.msra.mxu0 0.0
          %864 = vmatprep.subr.mxu0 0.0
          %865 = vmatpush2.msra.mxu0 0.0
          %866 = vmatprep.subr.mxu0 0.0
          %867 = vmatpush2.msra.mxu0 0.0
          %868 = vmatprep.subr.mxu0 0.0
          %869 = vmatpush2.msra.mxu0 0.0
          %870 = vmatprep.subr.mxu0 0.0
          %871 = vmatpush2.msra.mxu0 0.0
          %872 = vmatprep.subr.mxu0 0.0
          %873 = vmatpush2.msra.mxu0 0.0
          %874 = vmatprep.subr.mxu0 0.0
          %875 = vmatpush2.msra.mxu0 0.0
          %876 = vmatprep.subr.mxu0 0.0
          %877 = vmatpush2.msra.mxu0 0.0
          %878 = vmatprep.subr.mxu0 0.0
          %879 = vmatpush2.msra.mxu0 0.0
          %880 = vmatprep.subr.mxu0 0.0
          %881 = vmatpush2.msra.mxu0 0.0
          %882 = vmatprep.subr.mxu0 0.0
          %883 = vmatpush2.msra.mxu0 0.0
          %884 = vmatprep.mubr.f32.mxu0 0.0
          %885 = vmatmul.mubr.f32.gmra.mxu0 %v773
          %v886 = vpop.f32.mrf.mxu0
          %v887 = vadd.f32 %v770, %v886
          %v888 = vpop.f32.mrf.mxu0
          %889 = vmatprep.mubr.f32.mxu0 0.0
          %890 = vmatmul.mubr.f32.gmra.mxu0 %v776
          %v891 = vpop.f32.mrf.mxu0
          %v892 = vadd.f32 %v770, %v891
          %v893 = vpop.f32.mrf.mxu0
          %894 = vmatprep.mubr.f32.mxu0 0.0
          %895 = vmatmul.mubr.f32.gmra.mxu0 %v779
          %v896 = vpop.f32.mrf.mxu0
          %v897 = vadd.f32 %v770, %v896
          %v898 = vpop.f32.mrf.mxu0
          %899 = vmatprep.mubr.f32.mxu0 0.0
          %900 = vmatmul.mubr.f32.gmra.mxu0 %v782
          %v901 = vpop.f32.mrf.mxu0
          %v902 = vadd.f32 %v770, %v901
          %v903 = vpop.f32.mrf.mxu0
          %904 = vmatprep.mubr.f32.mxu0 0.0
          %905 = vmatmul.mubr.f32.gmra.mxu0 %v785
          %v906 = vpop.f32.mrf.mxu0
          %v907 = vadd.f32 %v770, %v906
          %v908 = vpop.f32.mrf.mxu0
          %909 = vmatprep.mubr.f32.mxu0 0.0
          %910 = vmatmul.mubr.f32.gmra.mxu0 %v788
          %v911 = vpop.f32.mrf.mxu0
          %v912 = vadd.f32 %v770, %v911
          %v913 = vpop.f32.mrf.mxu0
          %914 = vmatprep.mubr.f32.mxu0 0.0
          %915 = vmatmul.mubr.f32.gmra.mxu0 %v791
          %v916 = vpop.f32.mrf.mxu0
          %v917 = vadd.f32 %v770, %v916
          %v918 = vpop.f32.mrf.mxu0
          %919 = vmatprep.mubr.f32.mxu0 0.0
          %920 = vmatmul.mubr.f32.gmra.mxu0 %v794
          %v921 = vpop.f32.mrf.mxu0
          %v922 = vadd.f32 %v770, %v921
          %v923 = vpop.f32.mrf.mxu0
          %924 = vmatprep.mubr.f32.mxu0 0.0
          %925 = vmatmul.mubr.f32.gmra.mxu0 %v797
          %v926 = vpop.f32.mrf.mxu0
          %v927 = vadd.f32 %v770, %v926
          %v928 = vpop.f32.mrf.mxu0
          %929 = vmatprep.mubr.f32.mxu0 0.0
          %930 = vmatmul.mubr.f32.gmra.mxu0 %v800
          %v931 = vpop.f32.mrf.mxu0
          %v932 = vadd.f32 %v770, %v931
          %v933 = vpop.f32.mrf.mxu0
          %934 = vmatprep.mubr.f32.mxu0 0.0
          %935 = vmatmul.mubr.f32.gmra.mxu0 %v803
          %v936 = vpop.f32.mrf.mxu0
          %v937 = vadd.f32 %v770, %v936
          %v938 = vpop.f32.mrf.mxu0
          %939 = vmatprep.mubr.f32.mxu0 0.0
          %940 = vmatmul.mubr.f32.gmra.mxu0 %v806
          %v941 = vpop.f32.mrf.mxu0
          %v942 = vadd.f32 %v770, %v941
          %v943 = vpop.f32.mrf.mxu0
          %944 = vmatprep.mubr.f32.mxu0 0.0
          %945 = vmatmul.mubr.f32.gmra.mxu0 %v809
          %v946 = vpop.f32.mrf.mxu0
          %v947 = vadd.f32 %v770, %v946
          %v948 = vpop.f32.mrf.mxu0
          %949 = vmatprep.mubr.f32.mxu0 0.0
          %950 = vmatmul.mubr.f32.gmra.mxu0 %v812
          %v951 = vpop.f32.mrf.mxu0
          %v952 = vadd.f32 %v770, %v951
          %v953 = vpop.f32.mrf.mxu0
          %954 = vmatprep.mubr.f32.mxu0 0.0
          %955 = vmatmul.mubr.f32.gmra.mxu0 %v815
          %v956 = vpop.f32.mrf.mxu0
          %v957 = vadd.f32 %v770, %v956
          %v958 = vpop.f32.mrf.mxu0
          %959 = vmatprep.mubr.f32.mxu0 0.0
          %960 = vmatmul.mubr.f32.gmra.mxu0 %v818
          %v961 = vpop.f32.mrf.mxu0
          %v962 = vadd.f32 %v770, %v961
          %v963 = vpop.f32.mrf.mxu0
          %964 = vdwg.mxu0
          %965 = vst [vmem:[%s374] sm:$0xff] %v887
          %966 = vst [vmem:[%s374 + $0x8] sm:$0xff] %v892
          %967 = vst [vmem:[%s374 + $0x10] sm:$0xff] %v897
          %968 = vst [vmem:[%s374 + $0x18] sm:$0xff] %v902
          %969 = vst [vmem:[%s374 + $0x20] sm:$0xff] %v907
          %970 = vst [vmem:[%s374 + $0x28] sm:$0xff] %v912
          %971 = vst [vmem:[%s374 + $0x30] sm:$0xff] %v917
          %972 = vst [vmem:[%s374 + $0x38] sm:$0xff] %v922
          %973 = vst [vmem:[%s374 + $0x40] sm:$0xff] %v927
          %974 = vst [vmem:[%s374 + $0x48] sm:$0xff] %v932
          %975 = vst [vmem:[%s374 + $0x50] sm:$0xff] %v937
          %976 = vst [vmem:[%s374 + $0x58] sm:$0xff] %v942
          %977 = vst [vmem:[%s374 + $0x60] sm:$0xff] %v947
          %978 = vst [vmem:[%s374 + $0x68] sm:$0xff] %v952
          %979 = vst [vmem:[%s374 + $0x70] sm:$0xff] %v957
          %980 = vst [vmem:[%s374 + $0x78] sm:$0xff] %v962
        $region89: #{tpu_custom_call.1} parent=76 // pred_fallthru
          _
        %s981 = sand.u32 %s161, 1
        %s982 = scalar_lea.sflag [#allocation5], %s981
        %s983 = sand.u32 %s161, 1
        %s984 = smul.addr %s983, 128
        %s985 = scalar_lea.vmem [#allocation4], %s984
        // Predicated region
        $region90: #{tpu_custom_call.1} parent=76 // pred_check
          %p986 = pneg %p171
        $region91: #{tpu_custom_call.1} parent=76 // pred_check_branch
          %988 = sbr.rel (%p986) target = $region93
        $region92: #{tpu_custom_call.1} parent=76 // pred_region
          %s989 = smul.u32 16, %s23
          %s991 = ssub.s32 2048, 2048
          %992 = vsyncadd %s982, %s991
          %s993 = smul.addr %s989, 128
          %s994 = scalar_lea.hbm %s5, %s993
          %s995 = sshll.u32 %s985, 4
          %s996 = int_to_ptr.vmem [resolvable:$true] %s995
          %1001 = dma.vmem_to_hbm [thread:$0]  %s996, 2048, %s994, %s982, 128, 128, 8
        $region93: #{tpu_custom_call.1} parent=76 // pred_fallthru
          _
      $region77: #{tpu_custom_call.1} parent=5 // pred_fallthru
        _
      %p1002 = scmp.le.s32.totalorder 2, %s14
      // Predicated region
      $region94: #{tpu_custom_call.1} parent=5 // pred_check
        %p1003 = pneg %p1002
      $region95: #{tpu_custom_call.1} parent=5 // pred_check_branch
        %1005 = sbr.rel (%p1003) target = $region97
      $region96: #{tpu_custom_call.1} parent=5 // pred_region
        %s1006 = ssub.s32 %s14, 2
        // Predicated region
        $region98: #{tpu_custom_call.1} parent=96 // pred_check
          %p1007 = pneg %p177
        $region99: #{tpu_custom_call.1} parent=96 // pred_check_branch
          %1009 = sbr.rel (%p1007) target = $region101
        $region100: #{tpu_custom_call.1} parent=96 // pred_region
          %s1010 = sand.u32 %s162, 1
          %s1011 = scalar_lea.sflag [#allocation5], %s1010
          %s1012 = sand.u32 %s162, 1
          %s1013 = smul.addr %s1012, 128
          %s1014 = scalar_lea.vmem [#allocation4], %s1013
          %1015 = dma.done %s1011, 2048
        $region101: #{tpu_custom_call.1} parent=96 // pred_fallthru
          _
      $region97: #{tpu_custom_call.1} parent=5 // pred_fallthru
        _
    $region6: #{tpu_custom_call.1} parent=1 // loop_footer
      %s18 = sadd.s32 1, %s14
    $region7: #{tpu_custom_call.1} parent=1 // loop_footer_branch
      %13 = sbr.rel target = $region3
    $region8: #{tpu_custom_call.1} parent=1 // loop_exit
      _
    %1016 = vsyncpa [#allocation5], 1
    %s1017 = scalar_lea.sflag [#allocation5], 1
    %1018 = vsyncpa %s1017, 1

</llo_original>
